<compile_context>
chip_gen: v6e
topology: v6e:2x2x1
jax: 0.10.0
libtpu: 0.0.40
codegen_flags: <defaults>
</compile_context>

<pallas_src>
import functools

import jax
import jax.numpy as jnp
from jax.experimental import pallas as pl
from jax.experimental.pallas import tpu as pltpu


def _round_up(x, m):
    return ((x + m - 1) // m) * m


def _patch_embed_kernel(p_ref, w_ref, b_ref, o_ref):
    # p_ref: (TM, K) bf16 patch tile, w_ref: (K, Ep) bf16 VMEM-resident weight,
    # b_ref: (1, Ep) f32 bias, o_ref: (TM, Ep) output tile.
    acc = jnp.dot(p_ref[...], w_ref[...], preferred_element_type=jnp.float32)
    o_ref[...] = (acc + b_ref[...]).astype(o_ref.dtype)


@functools.partial(jax.jit, static_argnames=("patch_size", "tm", "out_dtype"))
def patch_embedding(x, weight, bias, patch_size, *, tm=512, out_dtype=None):
    """x: (B, C, H, W); weight: (E, C, P, P) (Conv2d layout); bias: (E,).

    Returns (B, N, E) with N = (H // P) * (W // P).
    """
    B, C, H, W = x.shape
    E = weight.shape[0]
    P = patch_size
    hP, wP = H // P, W // P
    N = hP * wP
    K = C * P * P
    M = B * N
    out_dtype = x.dtype if out_dtype is None else out_dtype

    # --- glue (plain JAX, fused / const-folded under the same jit) ---
    # Cast to bf16 first so the materialized patch matrix costs half the HBM bytes.
    # TODO(synk): fuse the patchify into the kernel via an x in_spec over (B, hP) strips
    # so the (M, K) patch matrix never round-trips HBM at all.
    xb = x.astype(jnp.bfloat16)
    patches = xb.reshape(B, C, hP, P, wP, P)
    patches = patches.transpose(0, 2, 4, 1, 3, 5).reshape(M, K)   # (M, K) bf16, (c,ph,pw) order
    w2d = weight.reshape(E, K).T.astype(jnp.bfloat16)             # (K, E) bf16
    b2d = bias.reshape(1, E).astype(jnp.float32)                  # bias added in f32

    # Lane-dense weight columns / output: pad E to a multiple of 128 (tiny tensors only).
    Ep = _round_up(E, 128)
    if Ep != E:
        w2d = jnp.pad(w2d, ((0, 0), (0, Ep - E)))
        b2d = jnp.pad(b2d, ((0, 0), (0, Ep - E)))

    # --- tile selection ---
    # Balance M tiles so the ragged tail is small; no explicit pad of the patch matrix
    # (Pallas clips the edge block's DMA and masks its out-of-range output stores).
    n_m = pl.cdiv(M, tm)
    TM = _round_up(pl.cdiv(M, n_m), 8)
    grid = (pl.cdiv(M, TM),)

    out_itemsize = jnp.dtype(out_dtype).itemsize
    # Double-buffered per-step VMEM footprint (bf16 operands, f32 bias, out_dtype output).
    block_bytes = 2 * (TM * K * 2 + K * Ep * 2 + Ep * 4 + TM * Ep * out_itemsize)
    # ~2x real need; floor at v5e's 16 MiB default, cap at 32 MiB for v7x headroom.
    vmem_limit = int(min(max(2 * block_bytes, 16 * 1024 * 1024), 32 * 1024 * 1024))

    cost = pl.CostEstimate(
        flops=2 * M * K * Ep,
        transcendentals=0,
        bytes_accessed=M * K * 2 + K * Ep * 2 + Ep * 4 + M * Ep * out_itemsize,
    )

    out = pl.pallas_call(
        _patch_embed_kernel,
        out_shape=jax.ShapeDtypeStruct((M, Ep), out_dtype),
        grid_spec=pl.GridSpec(
            grid=grid,
            in_specs=[
                pl.BlockSpec((TM, K), lambda i: (i, 0)),    # patches: streamed over M
                pl.BlockSpec((K, Ep), lambda i: (0, 0)),    # weight : VMEM-resident
                pl.BlockSpec((1, Ep), lambda i: (0, 0)),    # bias   : VMEM-resident
            ],
            out_specs=pl.BlockSpec((TM, Ep), lambda i: (i, 0)),
        ),
        compiler_params=pltpu.CompilerParams(
            dimension_semantics=("parallel",),
            vmem_limit_bytes=vmem_limit,
        ),
        cost_estimate=cost,
    )(patches, w2d, b2d)

    # Drop E padding, restore (B, N, E).
    return out[:, :E].reshape(B, N, E)


if __name__ == "__main__":
    # Small shapes consistent with the module: img=16, patch=4 -> 16 patches.
    B, C, IMG, P, E = 2, 4, 16, 4, 32

    key = jax.random.PRNGKey(0)
    kx, kw, kb = jax.random.split(key, 3)
    x = jax.random.normal(kx, (B, C, IMG, IMG), dtype=jnp.float32)
    # Deterministic synthetic parameters (Conv2d weight shape: (E, C, P, P)).
    weight = jax.random.normal(kw, (E, C, P, P), dtype=jnp.float32) * 0.02
    bias = jax.random.normal(kb, (E,), dtype=jnp.float32) * 0.02

    out = jax.block_until_ready(patch_embedding(x, weight, bias, patch_size=P))

    # Reference check against plain-JAX strided conv semantics (f32 reference;
    # tolerance loosened because the kernel's MXU operands are bf16).
    ref = jax.lax.conv_general_dilated(
        x, weight, window_strides=(P, P), padding="VALID",
        dimension_numbers=("NCHW", "OIHW", "NCHW"),
    ) + bias.reshape(1, E, 1, 1)
    ref = ref.reshape(B, E, -1).transpose(0, 2, 1)  # flatten(2).transpose(1,2)
    assert out.shape == (B, (IMG // P) ** 2, E)
    assert jnp.allclose(out, ref, atol=2e-2, rtol=2e-2)

    print("KERNEL_OK")
</pallas_src>

<mosaic_0001>
module attributes {stable_mosaic.version = 11 : i64} {
  func.func @_patch_embed_kernel(%arg0: i32, %arg1: memref<32x64xbf16, #tpu.memory_space<vmem>>, %arg2: memref<64x128xbf16, #tpu.memory_space<vmem>>, %arg3: memref<1x128xf32, #tpu.memory_space<vmem>>, %arg4: memref<32x128xf32, #tpu.memory_space<vmem>>) attributes {dimension_semantics = [#tpu.dimension_semantics<parallel>], iteration_bounds = array<i64: 1>, scalar_prefetch = 0 : i64, scratch_operands = 0 : i64, tpu.core_type = #tpu.core_type<tc>, window_params = [{transform_indices = @transform_0, window_bounds = array<i64: 32, 64>}, {pipeline_mode = #tpu.pipeline_mode<synchronous>, transform_indices = @transform_1, window_bounds = array<i64: 64, 128>}, {pipeline_mode = #tpu.pipeline_mode<synchronous>, transform_indices = @transform_2, window_bounds = array<i64: 1, 128>}, {transform_indices = @transform_3, window_bounds = array<i64: 32, 128>}]} {
    %c0 = arith.constant 0 : index
    %c0_0 = arith.constant 0 : index
    %0 = vector.load %arg1[%c0, %c0_0] : memref<32x64xbf16, #tpu.memory_space<vmem>>, vector<32x64xbf16>
    %c0_1 = arith.constant 0 : index
    %c0_2 = arith.constant 0 : index
    %1 = vector.load %arg2[%c0_1, %c0_2] : memref<64x128xbf16, #tpu.memory_space<vmem>>, vector<64x128xbf16>
    %cst = arith.constant dense<0.000000e+00> : vector<32x128xf32>
    %2 = tpu.matmul %0, %1, %cst {dimension_numbers = #tpu.dot_dimension_numbers<[1], [0], [0], [1], [0, 0, 1, 1], [], []>} : vector<32x64xbf16>, vector<64x128xbf16>, vector<32x128xf32> -> vector<32x128xf32>
    %c0_3 = arith.constant 0 : index
    %c0_4 = arith.constant 0 : index
    %3 = vector.load %arg3[%c0_3, %c0_4] : memref<1x128xf32, #tpu.memory_space<vmem>>, vector<1x128xf32>
    %4 = vector.broadcast %3 : vector<1x128xf32> to vector<32x128xf32>
    %5 = arith.addf %2, %4 : vector<32x128xf32>
    %c0_5 = arith.constant 0 : index
    %c0_6 = arith.constant 0 : index
    %6 = vector.load %arg4[%c0_5, %c0_6] : memref<32x128xf32, #tpu.memory_space<vmem>>, vector<32x128xf32>
    tpu.vector_store %arg4[%c0_5, %c0_6], %5 {strides = array<i32>} : memref<32x128xf32, #tpu.memory_space<vmem>>, vector<32x128xf32>,
    return
  }
  func.func @transform_0(%arg0: i32) -> (i32, i32) {
    %c0_i32 = arith.constant 0 : i32
    %c0_i32_0 = arith.constant 0 : i32
    return %arg0, %c0_i32 : i32, i32
  }
  func.func @transform_1(%arg0: i32) -> (i32, i32) {
    %c0_i32 = arith.constant 0 : i32
    %c0_i32_0 = arith.constant 0 : i32
    %c0_i32_1 = arith.constant 0 : i32
    return %c0_i32, %c0_i32_0 : i32, i32
  }
  func.func @transform_2(%arg0: i32) -> (i32, i32) {
    %c0_i32 = arith.constant 0 : i32
    %c0_i32_0 = arith.constant 0 : i32
    %c0_i32_1 = arith.constant 0 : i32
    return %c0_i32, %c0_i32_0 : i32, i32
  }
  func.func @transform_3(%arg0: i32) -> (i32, i32) {
    %c0_i32 = arith.constant 0 : i32
    %c0_i32_0 = arith.constant 0 : i32
    return %arg0, %c0_i32 : i32, i32
  }
}

</mosaic_0001>

<llo_original>
// kernel: patch_embedding.1
$region0: #{patch_embedding.1}
  #allocation0 [shape = 'u32[]', space=smem, size = 0x4, offset = 0x4, fixed_abs, tag = 'smem constant byte address 0x4 - core index']
  #allocation1 [shape = 'u32[144,128]{1,0:T(1,128)}', space=vmem, size = 0x12000, scoped, tag = 'internal scratch']
  %s0 = inlined_call_operand.vmem [shape: bf16[32,64], index: 0, kind: input, shape index: {}]
  %s1 = inlined_call_operand.vmem [shape: bf16[64,128], index: 1, kind: input, shape index: {}]
  %s2 = inlined_call_operand.vmem [shape: f32[1,128], index: 2, kind: input, shape index: {}]
  %s3 = inlined_call_operand.hbm [shape: f32[32,128], index: 3, kind: output, shape index: {}]
  %s4 = sld [smem:[#allocation0]]
  $region22: #{patch_embedding.1} parent=0
    _
  %s6 = ssub.s32 1, %s4
  %s7 = scalar_select 0, %s6, %s4
  $region1: #{patch_embedding.1} parent=0
    #allocation2 [shape = 'u8[16384]{0}', space=vmem, size = 0x4000, scoped, tag = 'output window, operand 0, single buffered']
    #allocation3 [shape = 's32[1]{0}', space=sflag, size = 0x4, scoped, tag = 'scoped memory for patch_embedding.1']
    %8 = vsyncpa [#allocation3], 0
    // Predicated region
    $region2: #{patch_embedding.1} parent=1 // pred_check
      _
    $region3: #{patch_embedding.1} parent=1 // pred_check_branch
      %10 = sbr.rel (0) target = $region5
    $region4: #{patch_embedding.1} parent=1 // pred_region
      _
    $region5: #{patch_embedding.1} parent=1 // pred_fallthru
      _
    // Predicated region
    $region6: #{patch_embedding.1} parent=1 // pred_check
      _
    $region7: #{patch_embedding.1} parent=1 // pred_check_branch
      %12 = sbr.rel (0) target = $region9
    $region8: #{patch_embedding.1} parent=1 // pred_region
      _
    $region9: #{patch_embedding.1} parent=1 // pred_fallthru
      _
    // Predicated region
    $region10: #{patch_embedding.1} parent=1 // pred_check
      _
    $region11: #{patch_embedding.1} parent=1 // pred_check_branch
      %14 = sbr.rel (0) target = $region13
    $region12: #{patch_embedding.1} parent=1 // pred_region
      _
    $region13: #{patch_embedding.1} parent=1 // pred_fallthru
      _
    %v16 = vld [vmem:[%s0] sm:$0xf]
    %v17 = vld [vmem:[%s0 + $0x4] sm:$0xf]
    %v18 = vld [vmem:[%s0 + $0x8] sm:$0xf]
    %v19 = vld [vmem:[%s0 + $0xc] sm:$0xf]
    %v20 = vld [vmem:[%s1] sm:$0xf]
    %v21 = vld [vmem:[%s1 + $0x4] sm:$0xf]
    %v22 = vld [vmem:[%s1 + $0x8] sm:$0xf]
    %v23 = vld [vmem:[%s1 + $0xc] sm:$0xf]
    %v24 = vld [vmem:[%s1 + $0x10] sm:$0xf]
    %v25 = vld [vmem:[%s1 + $0x14] sm:$0xf]
    %v26 = vld [vmem:[%s1 + $0x18] sm:$0xf]
    %v27 = vld [vmem:[%s1 + $0x1c] sm:$0xf]
    %v28 = vld [vmem:[%s2] sm:$0x1]
    %v30 = vlaneseq
    %v31 = vshrl.u32 %v30, 7
    %v32 = vsub.s32 0, %v31
    %v33 = vrot.slane %v28, %v32
    %v39 = vunpack.c.l.b16 %v16
    %v40 = vunpack.c.l.b16 %v17
    %v41 = vunpack.c.l.b16 %v18
    %v42 = vunpack.c.l.b16 %v19
    %v43 = vpack.c.b16 %v40, %v39
    %v44 = vpack.c.b16 %v42, %v41
    %v53 = vunpack.c.l.b16 %v20
    %v54 = vunpack.c.l.b16 %v21
    %v55 = vunpack.c.l.b16 %v22
    %v56 = vunpack.c.l.b16 %v23
    %v57 = vunpack.c.l.b16 %v24
    %v58 = vunpack.c.l.b16 %v25
    %v59 = vunpack.c.l.b16 %v26
    %v60 = vunpack.c.l.b16 %v27
    %v61 = vpack.c.b16 %v54, %v53
    %v62 = vpack.c.b16 %v56, %v55
    %v63 = vpack.c.b16 %v58, %v57
    %v64 = vpack.c.b16 %v60, %v59
    %vm69 = vcmask 523264
    %v71 = vsel %vm69, %v43, 0
    %v74 = vsel %vm69, %v44, 0
    %76 = vmatprep.subr.bf16.mxu0 0
    %77 = vmatpush1.bf16.msra.mxu0 0
    %78 = vmatprep.subr.bf16.mxu0 0
    %79 = vmatpush1.bf16.msra.mxu0 0
    %80 = vmatprep.subr.bf16.mxu0 0
    %81 = vmatpush1.bf16.msra.mxu0 0
    %82 = vmatprep.subr.bf16.mxu0 0
    %83 = vmatpush1.bf16.msra.mxu0 0
    %84 = vmatprep.subr.bf16.mxu0 0
    %85 = vmatpush1.bf16.msra.mxu0 %v64
    %86 = vmatprep.subr.bf16.mxu0 0
    %87 = vmatpush1.bf16.msra.mxu0 %v63
    %88 = vmatprep.subr.bf16.mxu0 0
    %89 = vmatpush1.bf16.msra.mxu0 %v62
    %90 = vmatprep.subr.bf16.mxu0 0
    %91 = vmatpush1.bf16.msra.mxu0 %v61
    %92 = vmatprep.subr.bf16.mxu0 0
    %93 = vmatpush2.bf16.msra.mxu0 0
    %94 = vmatprep.subr.bf16.mxu0 0
    %95 = vmatpush2.bf16.msra.mxu0 0
    %96 = vmatprep.subr.bf16.mxu0 0
    %97 = vmatpush2.bf16.msra.mxu0 0
    %98 = vmatprep.subr.bf16.mxu0 0
    %99 = vmatpush2.bf16.msra.mxu0 0
    %100 = vmatprep.subr.bf16.mxu0 0
    %101 = vmatpush2.bf16.msra.mxu0 0
    %102 = vmatprep.subr.bf16.mxu0 0
    %103 = vmatpush2.bf16.msra.mxu0 0
    %104 = vmatprep.subr.bf16.mxu0 0
    %105 = vmatpush2.bf16.msra.mxu0 0
    %106 = vmatprep.subr.bf16.mxu0 0
    %107 = vmatpush2.bf16.msra.mxu0 0
    %108 = vmatprep.mubr.bf16.mxu0 0
    %109 = vmatmul.mubr.bf16.gmra.mxu0 %v71
    %v110 = vpop.f32.mrf.mxu0
    %v111 = vadd.f32 %v33, %v110
    %v112 = vpop.f32.mrf.mxu0
    %v113 = vpop.f32.mrf.mxu0
    %v114 = vadd.f32 %v33, %v113
    %v115 = vpop.f32.mrf.mxu0
    %116 = vmatprep.mubr.bf16.mxu0 0
    %117 = vmatmul.mubr.bf16.gmra.mxu0 %v74
    %v118 = vpop.f32.mrf.mxu0
    %v119 = vadd.f32 %v33, %v118
    %v120 = vpop.f32.mrf.mxu0
    %v121 = vpop.f32.mrf.mxu0
    %v122 = vadd.f32 %v33, %v121
    %v123 = vpop.f32.mrf.mxu0
    %124 = vdwg.mxu0
    %125 = vst [vmem:[#allocation2] sm:$0xff] %v111
    %126 = vst [vmem:[#allocation2 + $0x8] sm:$0xff] %v114
    %127 = vst [vmem:[#allocation2 + $0x10] sm:$0xff] %v119
    %128 = vst [vmem:[#allocation2 + $0x18] sm:$0xff] %v122
    // Predicated region
    $region14: #{patch_embedding.1} parent=1 // pred_check
      _
    $region15: #{patch_embedding.1} parent=1 // pred_check_branch
      %130 = sbr.rel (0) target = $region17
    $region16: #{patch_embedding.1} parent=1 // pred_region
      %s132 = ssub.s32 512, 512
      %133 = vsyncadd [#allocation3], %s132
      %s134 = sshll.u32 [#allocation2], 4
      %s135 = int_to_ptr.vmem [resolvable:$true] %s134
      %140 = dma.vmem_to_hbm [thread:$0]  %s135, 512, %s3, [#allocation3], 128, 128, 8
    $region17: #{patch_embedding.1} parent=1 // pred_fallthru
      _
    // Predicated region
    $region18: #{patch_embedding.1} parent=1 // pred_check
      _
    $region19: #{patch_embedding.1} parent=1 // pred_check_branch
      %142 = sbr.rel (0) target = $region21
    $region20: #{patch_embedding.1} parent=1 // pred_region
      %143 = dma.done [#allocation3], 512
    $region21: #{patch_embedding.1} parent=1 // pred_fallthru
      _
    %144 = vsyncpa [#allocation3], 1

</llo_original>
